<compile_context>
chip_gen: v5e
topology: v5e:2x2
jax: 0.10.0
libtpu: 0.0.40
codegen_flags: <defaults>
</compile_context>

<pallas_src>
import functools

import jax
import jax.numpy as jnp
from jax.experimental import pallas as pl
from jax.experimental.pallas import tpu as pltpu


def _sparsemax_kernel(x_ref, o_ref):
    """Sparsemax along axis 0 of one (L, TILE_COLS) block (one problem/lane)."""
    z = x_ref[...].astype(jnp.float32)
    L = z.shape[0]

    # Shift by the per-column max (matches the torch code; result unchanged).
    z = z - jnp.max(z, axis=0, keepdims=True)

    # Pairwise rank / prefix-sum, statically unrolled over the (small) logit
    # axis.  Only (L, TILE) tiles are live; no bool->f32 mask materialization
    # of an (L, L, TILE) tensor, no index tie-break mask.
    n = jnp.zeros_like(z)
    s = jnp.zeros_like(z)
    for q in range(L):                       # static unroll, L is small
        zq = z[q:q + 1, :]                   # (1, TC), sublane-broadcast row q
        at_or_before = zq >= z               # (L, TC) bool
        n = n + jnp.where(at_or_before, 1.0, 0.0)
        s = s + jnp.where(at_or_before, zq, 0.0)

    # Support test (the "is_gt" test): 1 + rank * z > prefix_sum.
    in_support = 1.0 + n * z > s                                      # (L, TC)
    k = jnp.max(jnp.where(in_support, n, 0.0), axis=0, keepdims=True)
    sum_support = jnp.sum(jnp.where(in_support, z, 0.0), axis=0, keepdims=True)
    tau = (sum_support - 1.0) / k            # k >= 1 always (top element)

    o_ref[...] = jnp.maximum(z - tau, 0.0).astype(o_ref.dtype)


def _choose_tile_cols(n_rows, n_logits):
    """Lane-tile width (problems per block), derived from L at trace time."""
    LANE = 128
    # Working set per problem column is ~8 live f32 rows of length L (z, n, s,
    # temps, double-buffered IO blocks).  A ~4 MiB budget keeps us well inside
    # the scoped-VMEM default on v5e (16 MiB) and v7x (32 MiB scoped / 64 MiB
    # physical), while blocks stay >= 512 lanes when possible to amortize the
    # ~0.35 us per-grid-step overhead.
    budget_bytes = 4 << 20
    tc = budget_bytes // max(1, 8 * 4 * n_logits)
    tc = max(LANE, min(2048, (tc // LANE) * LANE))
    # Never tile wider than the lane-padded problem count (avoids huge pads).
    tc = min(tc, pl.cdiv(n_rows, LANE) * LANE)
    # Keep >= 4 grid steps when there is enough work: feeds both v7x
    # TensorCores (dimension_semantics=("parallel",)) and the DMA pipeline.
    if n_rows >= 4 * LANE:
        tc = min(tc, max(LANE, ((n_rows // 4) // LANE) * LANE))
    return tc


@functools.partial(jax.jit, static_argnames=("dim",))
def sparsemax(x, dim=-1):
    """Sparsemax along `dim`, matching the PyTorch Sparsemax module."""
    dim = dim % x.ndim

    # Lane-dense 2-D view: logits on the leading/sublane axis, the independent
    # problems on the 128-wide lane axis.
    x_lf = jnp.moveaxis(x, dim, 0)
    moved_shape = x_lf.shape
    L = moved_shape[0]
    n_rows = 1
    for d in moved_shape[1:]:
        n_rows *= d
    x2d = x_lf.reshape(L, n_rows)

    tc = _choose_tile_cols(n_rows, L)
    n_pad = pl.cdiv(n_rows, tc) * tc
    if n_pad != n_rows:
        # Only the ragged tail is padded; padded columns compute a finite
        # sparsemax of all-zeros and are sliced away below.
        x2d = jnp.pad(x2d, ((0, 0), (0, n_pad - n_rows)))

    out2d = pl.pallas_call(
        _sparsemax_kernel,
        out_shape=jax.ShapeDtypeStruct((L, n_pad), x.dtype),
        grid_spec=pltpu.PrefetchScalarGridSpec(
            num_scalar_prefetch=0,
            grid=(n_pad // tc,),
            in_specs=[pl.BlockSpec((L, tc), lambda i: (0, i))],
            out_specs=pl.BlockSpec((L, tc), lambda i: (0, i)),
        ),
        compiler_params=pltpu.CompilerParams(
            dimension_semantics=("parallel",)),
    )(x2d)

    out = out2d[:, :n_rows].reshape(moved_shape)
    return jnp.moveaxis(out, 0, dim)


def _sparsemax_reference(x, dim=-1):
    """Pure-JAX reference (sort + cumsum), mirrors the PyTorch module."""
    xm = jnp.moveaxis(x, dim, -1).astype(jnp.float32)
    z = xm - jnp.max(xm, axis=-1, keepdims=True)
    zs = -jnp.sort(-z, axis=-1)
    L = z.shape[-1]
    rng = jnp.arange(1, L + 1, dtype=z.dtype)
    bound = 1.0 + rng * zs
    csum = jnp.cumsum(zs, axis=-1)
    is_gt = (bound > csum).astype(z.dtype)
    k = jnp.max(is_gt * rng, axis=-1, keepdims=True)
    tau = (jnp.sum(is_gt * zs, axis=-1, keepdims=True) - 1.0) / k
    out = jnp.maximum(z - tau, 0.0)
    return jnp.moveaxis(out, -1, dim).astype(x.dtype)


if __name__ == "__main__":
    key = jax.random.PRNGKey(0)
    # Small NCHW-style activation, sparsemax along the default last dim.
    x = jax.random.normal(key, (2, 4, 16, 16), dtype=jnp.float32) * 3.0

    y = sparsemax(x, dim=-1)
    y = jax.block_until_ready(y)
    y_ref = _sparsemax_reference(x, dim=-1)
    assert y.shape == x.shape and y.dtype == x.dtype
    assert jnp.allclose(y, y_ref, atol=1e-5, rtol=1e-5)
    assert jnp.allclose(jnp.sum(y, axis=-1), 1.0, atol=1e-4)

    # Non-default axis (channels) exercises the moveaxis / multi-block path.
    y1 = jax.block_until_ready(sparsemax(x, dim=1))
    y1_ref = _sparsemax_reference(x, dim=1)
    assert jnp.allclose(y1, y1_ref, atol=1e-5, rtol=1e-5)
    assert jnp.allclose(jnp.sum(y1, axis=1), 1.0, atol=1e-4)

    # Exact ties are handled identically to the sorted formulation.
    xt = jnp.round(x)
    yt = jax.block_until_ready(sparsemax(xt, dim=-1))
    yt_ref = _sparsemax_reference(xt, dim=-1)
    assert jnp.allclose(yt, yt_ref, atol=1e-5, rtol=1e-5)

    print("KERNEL_OK")
</pallas_src>

<mosaic_0001>
module attributes {stable_mosaic.version = 11 : i64} {
  func.func @_sparsemax_kernel(%arg0: i32, %arg1: memref<16x128xf32, #tpu.memory_space<vmem>>, %arg2: memref<16x128xf32, #tpu.memory_space<vmem>>) attributes {dimension_semantics = [#tpu.dimension_semantics<parallel>], iteration_bounds = array<i64: 1>, scalar_prefetch = 0 : i64, scratch_operands = 0 : i64, tpu.core_type = #tpu.core_type<tc>, window_params = [{transform_indices = @transform_0, window_bounds = array<i64: 16, 128>}, {transform_indices = @transform_1, window_bounds = array<i64: 16, 128>}]} {
    %c0 = arith.constant 0 : index
    %c0_0 = arith.constant 0 : index
    %0 = vector.load %arg1[%c0, %c0_0] : memref<16x128xf32, #tpu.memory_space<vmem>>, vector<16x128xf32>
    %cst = arith.constant dense<0xFF800000> : vector<128xf32>
    %1 = vector.multi_reduction <maximumf>, %0, %cst [0] : vector<16x128xf32> to vector<128xf32>
    %2 = vector.shape_cast %1 : vector<128xf32> to vector<1x128xf32>
    %3 = vector.broadcast %2 : vector<1x128xf32> to vector<16x128xf32>
    %4 = arith.subf %0, %3 : vector<16x128xf32>
    %cst_1 = arith.constant 0.000000e+00 : f32
    %5 = vector.broadcast %cst_1 : f32 to vector<16x128xf32>
    %cst_2 = arith.constant 0.000000e+00 : f32
    %6 = vector.broadcast %cst_2 : f32 to vector<16x128xf32>
    %7 = vector.extract_strided_slice %4 {offsets = [0, 0], sizes = [1, 128], strides = [1, 1]} : vector<16x128xf32> to vector<1x128xf32>
    %8 = vector.broadcast %7 : vector<1x128xf32> to vector<16x128xf32>
    %9 = arith.cmpf oge, %8, %4 : vector<16x128xf32>
    %cst_3 = arith.constant 1.000000e+00 : f32
    %cst_4 = arith.constant 0.000000e+00 : f32
    %10 = vector.broadcast %cst_3 : f32 to vector<16x128xf32>
    %11 = vector.broadcast %cst_4 : f32 to vector<16x128xf32>
    %12 = arith.select %9, %10, %11 : vector<16x128xi1>, vector<16x128xf32>
    %13 = arith.addf %5, %12 : vector<16x128xf32>
    %cst_5 = arith.constant 0.000000e+00 : f32
    %14 = vector.shape_cast %7 : vector<1x128xf32> to vector<1x128xf32>
    %15 = vector.broadcast %14 : vector<1x128xf32> to vector<16x128xf32>
    %16 = vector.broadcast %cst_5 : f32 to vector<16x128xf32>
    %17 = arith.select %9, %15, %16 : vector<16x128xi1>, vector<16x128xf32>
    %18 = arith.addf %6, %17 : vector<16x128xf32>
    %19 = vector.extract_strided_slice %4 {offsets = [1, 0], sizes = [1, 128], strides = [1, 1]} : vector<16x128xf32> to vector<1x128xf32>
    %20 = vector.broadcast %19 : vector<1x128xf32> to vector<16x128xf32>
    %21 = arith.cmpf oge, %20, %4 : vector<16x128xf32>
    %cst_6 = arith.constant 1.000000e+00 : f32
    %cst_7 = arith.constant 0.000000e+00 : f32
    %22 = vector.broadcast %cst_6 : f32 to vector<16x128xf32>
    %23 = vector.broadcast %cst_7 : f32 to vector<16x128xf32>
    %24 = arith.select %21, %22, %23 : vector<16x128xi1>, vector<16x128xf32>
    %25 = arith.addf %13, %24 : vector<16x128xf32>
    %cst_8 = arith.constant 0.000000e+00 : f32
    %26 = vector.shape_cast %19 : vector<1x128xf32> to vector<1x128xf32>
    %27 = vector.broadcast %26 : vector<1x128xf32> to vector<16x128xf32>
    %28 = vector.broadcast %cst_8 : f32 to vector<16x128xf32>
    %29 = arith.select %21, %27, %28 : vector<16x128xi1>, vector<16x128xf32>
    %30 = arith.addf %18, %29 : vector<16x128xf32>
    %31 = vector.extract_strided_slice %4 {offsets = [2, 0], sizes = [1, 128], strides = [1, 1]} : vector<16x128xf32> to vector<1x128xf32>
    %32 = vector.broadcast %31 : vector<1x128xf32> to vector<16x128xf32>
    %33 = arith.cmpf oge, %32, %4 : vector<16x128xf32>
    %cst_9 = arith.constant 1.000000e+00 : f32
    %cst_10 = arith.constant 0.000000e+00 : f32
    %34 = vector.broadcast %cst_9 : f32 to vector<16x128xf32>
    %35 = vector.broadcast %cst_10 : f32 to vector<16x128xf32>
    %36 = arith.select %33, %34, %35 : vector<16x128xi1>, vector<16x128xf32>
    %37 = arith.addf %25, %36 : vector<16x128xf32>
    %cst_11 = arith.constant 0.000000e+00 : f32
    %38 = vector.shape_cast %31 : vector<1x128xf32> to vector<1x128xf32>
    %39 = vector.broadcast %38 : vector<1x128xf32> to vector<16x128xf32>
    %40 = vector.broadcast %cst_11 : f32 to vector<16x128xf32>
    %41 = arith.select %33, %39, %40 : vector<16x128xi1>, vector<16x128xf32>
    %42 = arith.addf %30, %41 : vector<16x128xf32>
    %43 = vector.extract_strided_slice %4 {offsets = [3, 0], sizes = [1, 128], strides = [1, 1]} : vector<16x128xf32> to vector<1x128xf32>
    %44 = vector.broadcast %43 : vector<1x128xf32> to vector<16x128xf32>
    %45 = arith.cmpf oge, %44, %4 : vector<16x128xf32>
    %cst_12 = arith.constant 1.000000e+00 : f32
    %cst_13 = arith.constant 0.000000e+00 : f32
    %46 = vector.broadcast %cst_12 : f32 to vector<16x128xf32>
    %47 = vector.broadcast %cst_13 : f32 to vector<16x128xf32>
    %48 = arith.select %45, %46, %47 : vector<16x128xi1>, vector<16x128xf32>
    %49 = arith.addf %37, %48 : vector<16x128xf32>
    %cst_14 = arith.constant 0.000000e+00 : f32
    %50 = vector.shape_cast %43 : vector<1x128xf32> to vector<1x128xf32>
    %51 = vector.broadcast %50 : vector<1x128xf32> to vector<16x128xf32>
    %52 = vector.broadcast %cst_14 : f32 to vector<16x128xf32>
    %53 = arith.select %45, %51, %52 : vector<16x128xi1>, vector<16x128xf32>
    %54 = arith.addf %42, %53 : vector<16x128xf32>
    %55 = vector.extract_strided_slice %4 {offsets = [4, 0], sizes = [1, 128], strides = [1, 1]} : vector<16x128xf32> to vector<1x128xf32>
    %56 = vector.broadcast %55 : vector<1x128xf32> to vector<16x128xf32>
    %57 = arith.cmpf oge, %56, %4 : vector<16x128xf32>
    %cst_15 = arith.constant 1.000000e+00 : f32
    %cst_16 = arith.constant 0.000000e+00 : f32
    %58 = vector.broadcast %cst_15 : f32 to vector<16x128xf32>
    %59 = vector.broadcast %cst_16 : f32 to vector<16x128xf32>
    %60 = arith.select %57, %58, %59 : vector<16x128xi1>, vector<16x128xf32>
    %61 = arith.addf %49, %60 : vector<16x128xf32>
    %cst_17 = arith.constant 0.000000e+00 : f32
    %62 = vector.shape_cast %55 : vector<1x128xf32> to vector<1x128xf32>
    %63 = vector.broadcast %62 : vector<1x128xf32> to vector<16x128xf32>
    %64 = vector.broadcast %cst_17 : f32 to vector<16x128xf32>
    %65 = arith.select %57, %63, %64 : vector<16x128xi1>, vector<16x128xf32>
    %66 = arith.addf %54, %65 : vector<16x128xf32>
    %67 = vector.extract_strided_slice %4 {offsets = [5, 0], sizes = [1, 128], strides = [1, 1]} : vector<16x128xf32> to vector<1x128xf32>
    %68 = vector.broadcast %67 : vector<1x128xf32> to vector<16x128xf32>
    %69 = arith.cmpf oge, %68, %4 : vector<16x128xf32>
    %cst_18 = arith.constant 1.000000e+00 : f32
    %cst_19 = arith.constant 0.000000e+00 : f32
    %70 = vector.broadcast %cst_18 : f32 to vector<16x128xf32>
    %71 = vector.broadcast %cst_19 : f32 to vector<16x128xf32>
    %72 = arith.select %69, %70, %71 : vector<16x128xi1>, vector<16x128xf32>
    %73 = arith.addf %61, %72 : vector<16x128xf32>
    %cst_20 = arith.constant 0.000000e+00 : f32
    %74 = vector.shape_cast %67 : vector<1x128xf32> to vector<1x128xf32>
    %75 = vector.broadcast %74 : vector<1x128xf32> to vector<16x128xf32>
    %76 = vector.broadcast %cst_20 : f32 to vector<16x128xf32>
    %77 = arith.select %69, %75, %76 : vector<16x128xi1>, vector<16x128xf32>
    %78 = arith.addf %66, %77 : vector<16x128xf32>
    %79 = vector.extract_strided_slice %4 {offsets = [6, 0], sizes = [1, 128], strides = [1, 1]} : vector<16x128xf32> to vector<1x128xf32>
    %80 = vector.broadcast %79 : vector<1x128xf32> to vector<16x128xf32>
    %81 = arith.cmpf oge, %80, %4 : vector<16x128xf32>
    %cst_21 = arith.constant 1.000000e+00 : f32
    %cst_22 = arith.constant 0.000000e+00 : f32
    %82 = vector.broadcast %cst_21 : f32 to vector<16x128xf32>
    %83 = vector.broadcast %cst_22 : f32 to vector<16x128xf32>
    %84 = arith.select %81, %82, %83 : vector<16x128xi1>, vector<16x128xf32>
    %85 = arith.addf %73, %84 : vector<16x128xf32>
    %cst_23 = arith.constant 0.000000e+00 : f32
    %86 = vector.shape_cast %79 : vector<1x128xf32> to vector<1x128xf32>
    %87 = vector.broadcast %86 : vector<1x128xf32> to vector<16x128xf32>
    %88 = vector.broadcast %cst_23 : f32 to vector<16x128xf32>
    %89 = arith.select %81, %87, %88 : vector<16x128xi1>, vector<16x128xf32>
    %90 = arith.addf %78, %89 : vector<16x128xf32>
    %91 = vector.extract_strided_slice %4 {offsets = [7, 0], sizes = [1, 128], strides = [1, 1]} : vector<16x128xf32> to vector<1x128xf32>
    %92 = vector.broadcast %91 : vector<1x128xf32> to vector<16x128xf32>
    %93 = arith.cmpf oge, %92, %4 : vector<16x128xf32>
    %cst_24 = arith.constant 1.000000e+00 : f32
    %cst_25 = arith.constant 0.000000e+00 : f32
    %94 = vector.broadcast %cst_24 : f32 to vector<16x128xf32>
    %95 = vector.broadcast %cst_25 : f32 to vector<16x128xf32>
    %96 = arith.select %93, %94, %95 : vector<16x128xi1>, vector<16x128xf32>
    %97 = arith.addf %85, %96 : vector<16x128xf32>
    %cst_26 = arith.constant 0.000000e+00 : f32
    %98 = vector.shape_cast %91 : vector<1x128xf32> to vector<1x128xf32>
    %99 = vector.broadcast %98 : vector<1x128xf32> to vector<16x128xf32>
    %100 = vector.broadcast %cst_26 : f32 to vector<16x128xf32>
    %101 = arith.select %93, %99, %100 : vector<16x128xi1>, vector<16x128xf32>
    %102 = arith.addf %90, %101 : vector<16x128xf32>
    %103 = vector.extract_strided_slice %4 {offsets = [8, 0], sizes = [1, 128], strides = [1, 1]} : vector<16x128xf32> to vector<1x128xf32>
    %104 = vector.broadcast %103 : vector<1x128xf32> to vector<16x128xf32>
    %105 = arith.cmpf oge, %104, %4 : vector<16x128xf32>
    %cst_27 = arith.constant 1.000000e+00 : f32
    %cst_28 = arith.constant 0.000000e+00 : f32
    %106 = vector.broadcast %cst_27 : f32 to vector<16x128xf32>
    %107 = vector.broadcast %cst_28 : f32 to vector<16x128xf32>
    %108 = arith.select %105, %106, %107 : vector<16x128xi1>, vector<16x128xf32>
    %109 = arith.addf %97, %108 : vector<16x128xf32>
    %cst_29 = arith.constant 0.000000e+00 : f32
    %110 = vector.shape_cast %103 : vector<1x128xf32> to vector<1x128xf32>
    %111 = vector.broadcast %110 : vector<1x128xf32> to vector<16x128xf32>
    %112 = vector.broadcast %cst_29 : f32 to vector<16x128xf32>
    %113 = arith.select %105, %111, %112 : vector<16x128xi1>, vector<16x128xf32>
    %114 = arith.addf %102, %113 : vector<16x128xf32>
    %115 = vector.extract_strided_slice %4 {offsets = [9, 0], sizes = [1, 128], strides = [1, 1]} : vector<16x128xf32> to vector<1x128xf32>
    %116 = vector.broadcast %115 : vector<1x128xf32> to vector<16x128xf32>
    %117 = arith.cmpf oge, %116, %4 : vector<16x128xf32>
    %cst_30 = arith.constant 1.000000e+00 : f32
    %cst_31 = arith.constant 0.000000e+00 : f32
    %118 = vector.broadcast %cst_30 : f32 to vector<16x128xf32>
    %119 = vector.broadcast %cst_31 : f32 to vector<16x128xf32>
    %120 = arith.select %117, %118, %119 : vector<16x128xi1>, vector<16x128xf32>
    %121 = arith.addf %109, %120 : vector<16x128xf32>
    %cst_32 = arith.constant 0.000000e+00 : f32
    %122 = vector.shape_cast %115 : vector<1x128xf32> to vector<1x128xf32>
    %123 = vector.broadcast %122 : vector<1x128xf32> to vector<16x128xf32>
    %124 = vector.broadcast %cst_32 : f32 to vector<16x128xf32>
    %125 = arith.select %117, %123, %124 : vector<16x128xi1>, vector<16x128xf32>
    %126 = arith.addf %114, %125 : vector<16x128xf32>
    %127 = vector.extract_strided_slice %4 {offsets = [10, 0], sizes = [1, 128], strides = [1, 1]} : vector<16x128xf32> to vector<1x128xf32>
    %128 = vector.broadcast %127 : vector<1x128xf32> to vector<16x128xf32>
    %129 = arith.cmpf oge, %128, %4 : vector<16x128xf32>
    %cst_33 = arith.constant 1.000000e+00 : f32
    %cst_34 = arith.constant 0.000000e+00 : f32
    %130 = vector.broadcast %cst_33 : f32 to vector<16x128xf32>
    %131 = vector.broadcast %cst_34 : f32 to vector<16x128xf32>
    %132 = arith.select %129, %130, %131 : vector<16x128xi1>, vector<16x128xf32>
    %133 = arith.addf %121, %132 : vector<16x128xf32>
    %cst_35 = arith.constant 0.000000e+00 : f32
    %134 = vector.shape_cast %127 : vector<1x128xf32> to vector<1x128xf32>
    %135 = vector.broadcast %134 : vector<1x128xf32> to vector<16x128xf32>
    %136 = vector.broadcast %cst_35 : f32 to vector<16x128xf32>
    %137 = arith.select %129, %135, %136 : vector<16x128xi1>, vector<16x128xf32>
    %138 = arith.addf %126, %137 : vector<16x128xf32>
    %139 = vector.extract_strided_slice %4 {offsets = [11, 0], sizes = [1, 128], strides = [1, 1]} : vector<16x128xf32> to vector<1x128xf32>
    %140 = vector.broadcast %139 : vector<1x128xf32> to vector<16x128xf32>
    %141 = arith.cmpf oge, %140, %4 : vector<16x128xf32>
    %cst_36 = arith.constant 1.000000e+00 : f32
    %cst_37 = arith.constant 0.000000e+00 : f32
    %142 = vector.broadcast %cst_36 : f32 to vector<16x128xf32>
    %143 = vector.broadcast %cst_37 : f32 to vector<16x128xf32>
    %144 = arith.select %141, %142, %143 : vector<16x128xi1>, vector<16x128xf32>
    %145 = arith.addf %133, %144 : vector<16x128xf32>
    %cst_38 = arith.constant 0.000000e+00 : f32
    %146 = vector.shape_cast %139 : vector<1x128xf32> to vector<1x128xf32>
    %147 = vector.broadcast %146 : vector<1x128xf32> to vector<16x128xf32>
    %148 = vector.broadcast %cst_38 : f32 to vector<16x128xf32>
    %149 = arith.select %141, %147, %148 : vector<16x128xi1>, vector<16x128xf32>
    %150 = arith.addf %138, %149 : vector<16x128xf32>
    %151 = vector.extract_strided_slice %4 {offsets = [12, 0], sizes = [1, 128], strides = [1, 1]} : vector<16x128xf32> to vector<1x128xf32>
    %152 = vector.broadcast %151 : vector<1x128xf32> to vector<16x128xf32>
    %153 = arith.cmpf oge, %152, %4 : vector<16x128xf32>
    %cst_39 = arith.constant 1.000000e+00 : f32
    %cst_40 = arith.constant 0.000000e+00 : f32
    %154 = vector.broadcast %cst_39 : f32 to vector<16x128xf32>
    %155 = vector.broadcast %cst_40 : f32 to vector<16x128xf32>
    %156 = arith.select %153, %154, %155 : vector<16x128xi1>, vector<16x128xf32>
    %157 = arith.addf %145, %156 : vector<16x128xf32>
    %cst_41 = arith.constant 0.000000e+00 : f32
    %158 = vector.shape_cast %151 : vector<1x128xf32> to vector<1x128xf32>
    %159 = vector.broadcast %158 : vector<1x128xf32> to vector<16x128xf32>
    %160 = vector.broadcast %cst_41 : f32 to vector<16x128xf32>
    %161 = arith.select %153, %159, %160 : vector<16x128xi1>, vector<16x128xf32>
    %162 = arith.addf %150, %161 : vector<16x128xf32>
    %163 = vector.extract_strided_slice %4 {offsets = [13, 0], sizes = [1, 128], strides = [1, 1]} : vector<16x128xf32> to vector<1x128xf32>
    %164 = vector.broadcast %163 : vector<1x128xf32> to vector<16x128xf32>
    %165 = arith.cmpf oge, %164, %4 : vector<16x128xf32>
    %cst_42 = arith.constant 1.000000e+00 : f32
    %cst_43 = arith.constant 0.000000e+00 : f32
    %166 = vector.broadcast %cst_42 : f32 to vector<16x128xf32>
    %167 = vector.broadcast %cst_43 : f32 to vector<16x128xf32>
    %168 = arith.select %165, %166, %167 : vector<16x128xi1>, vector<16x128xf32>
    %169 = arith.addf %157, %168 : vector<16x128xf32>
    %cst_44 = arith.constant 0.000000e+00 : f32
    %170 = vector.shape_cast %163 : vector<1x128xf32> to vector<1x128xf32>
    %171 = vector.broadcast %170 : vector<1x128xf32> to vector<16x128xf32>
    %172 = vector.broadcast %cst_44 : f32 to vector<16x128xf32>
    %173 = arith.select %165, %171, %172 : vector<16x128xi1>, vector<16x128xf32>
    %174 = arith.addf %162, %173 : vector<16x128xf32>
    %175 = vector.extract_strided_slice %4 {offsets = [14, 0], sizes = [1, 128], strides = [1, 1]} : vector<16x128xf32> to vector<1x128xf32>
    %176 = vector.broadcast %175 : vector<1x128xf32> to vector<16x128xf32>
    %177 = arith.cmpf oge, %176, %4 : vector<16x128xf32>
    %cst_45 = arith.constant 1.000000e+00 : f32
    %cst_46 = arith.constant 0.000000e+00 : f32
    %178 = vector.broadcast %cst_45 : f32 to vector<16x128xf32>
    %179 = vector.broadcast %cst_46 : f32 to vector<16x128xf32>
    %180 = arith.select %177, %178, %179 : vector<16x128xi1>, vector<16x128xf32>
    %181 = arith.addf %169, %180 : vector<16x128xf32>
    %cst_47 = arith.constant 0.000000e+00 : f32
    %182 = vector.shape_cast %175 : vector<1x128xf32> to vector<1x128xf32>
    %183 = vector.broadcast %182 : vector<1x128xf32> to vector<16x128xf32>
    %184 = vector.broadcast %cst_47 : f32 to vector<16x128xf32>
    %185 = arith.select %177, %183, %184 : vector<16x128xi1>, vector<16x128xf32>
    %186 = arith.addf %174, %185 : vector<16x128xf32>
    %187 = vector.extract_strided_slice %4 {offsets = [15, 0], sizes = [1, 128], strides = [1, 1]} : vector<16x128xf32> to vector<1x128xf32>
    %188 = vector.broadcast %187 : vector<1x128xf32> to vector<16x128xf32>
    %189 = arith.cmpf oge, %188, %4 : vector<16x128xf32>
    %cst_48 = arith.constant 1.000000e+00 : f32
    %cst_49 = arith.constant 0.000000e+00 : f32
    %190 = vector.broadcast %cst_48 : f32 to vector<16x128xf32>
    %191 = vector.broadcast %cst_49 : f32 to vector<16x128xf32>
    %192 = arith.select %189, %190, %191 : vector<16x128xi1>, vector<16x128xf32>
    %193 = arith.addf %181, %192 : vector<16x128xf32>
    %cst_50 = arith.constant 0.000000e+00 : f32
    %194 = vector.shape_cast %187 : vector<1x128xf32> to vector<1x128xf32>
    %195 = vector.broadcast %194 : vector<1x128xf32> to vector<16x128xf32>
    %196 = vector.broadcast %cst_50 : f32 to vector<16x128xf32>
    %197 = arith.select %189, %195, %196 : vector<16x128xi1>, vector<16x128xf32>
    %198 = arith.addf %186, %197 : vector<16x128xf32>
    %199 = arith.mulf %193, %4 : vector<16x128xf32>
    %cst_51 = arith.constant 1.000000e+00 : f32
    %200 = vector.broadcast %cst_51 : f32 to vector<16x128xf32>
    %201 = arith.addf %200, %199 : vector<16x128xf32>
    %202 = arith.cmpf ogt, %201, %198 : vector<16x128xf32>
    %cst_52 = arith.constant 0.000000e+00 : f32
    %203 = vector.broadcast %cst_52 : f32 to vector<16x128xf32>
    %204 = arith.select %202, %193, %203 : vector<16x128xi1>, vector<16x128xf32>
    %cst_53 = arith.constant dense<0xFF800000> : vector<128xf32>
    %205 = vector.multi_reduction <maximumf>, %204, %cst_53 [0] : vector<16x128xf32> to vector<128xf32>
    %206 = vector.shape_cast %205 : vector<128xf32> to vector<1x128xf32>
    %cst_54 = arith.constant 0.000000e+00 : f32
    %207 = vector.broadcast %cst_54 : f32 to vector<16x128xf32>
    %208 = arith.select %202, %4, %207 : vector<16x128xi1>, vector<16x128xf32>
    %cst_55 = arith.constant dense<0.000000e+00> : vector<128xf32>
    %209 = vector.multi_reduction <add>, %208, %cst_55 [0] : vector<16x128xf32> to vector<128xf32>
    %210 = vector.shape_cast %209 : vector<128xf32> to vector<1x128xf32>
    %cst_56 = arith.constant 1.000000e+00 : f32
    %211 = vector.broadcast %cst_56 : f32 to vector<1x128xf32>
    %212 = arith.subf %210, %211 : vector<1x128xf32>
    %213 = arith.divf %212, %206 : vector<1x128xf32>
    %214 = vector.broadcast %213 : vector<1x128xf32> to vector<16x128xf32>
    %215 = arith.subf %4, %214 : vector<16x128xf32>
    %cst_57 = arith.constant 0.000000e+00 : f32
    %216 = vector.broadcast %cst_57 : f32 to vector<16x128xf32>
    %217 = arith.maximumf %215, %216 : vector<16x128xf32>
    %c0_58 = arith.constant 0 : index
    %c0_59 = arith.constant 0 : index
    %218 = vector.load %arg2[%c0_58, %c0_59] : memref<16x128xf32, #tpu.memory_space<vmem>>, vector<16x128xf32>
    tpu.vector_store %arg2[%c0_58, %c0_59], %217 {strides = array<i32>} : memref<16x128xf32, #tpu.memory_space<vmem>>, vector<16x128xf32>,
    return
  }
  func.func @transform_0(%arg0: i32) -> (i32, i32) {
    %c0_i32 = arith.constant 0 : i32
    %c0_i32_0 = arith.constant 0 : i32
    return %c0_i32, %arg0 : i32, i32
  }
  func.func @transform_1(%arg0: i32) -> (i32, i32) {
    %c0_i32 = arith.constant 0 : i32
    %c0_i32_0 = arith.constant 0 : i32
    return %c0_i32, %arg0 : i32, i32
  }
}

</mosaic_0001>

<llo_original>
// kernel: sparsemax.1
$region0: #{sparsemax.1}
  #allocation0 [shape = 'u32[]', space=smem, size = 0x4, offset = 0x4, fixed_abs, tag = 'smem constant byte address 0x4 - core index']
  #allocation1 [shape = 'u32[72,128]{1,0:T(1,128)}', space=vmem, size = 0x9000, scoped, tag = 'internal scratch']
  %s0 = inlined_call_operand.vmem [shape: f32[16,128], index: 0, kind: input, shape index: {}]
  %s1 = inlined_call_operand.vmem [shape: f32[16,128], index: 1, kind: output, shape index: {}]
  %s2 = sld [smem:[#allocation0]]
  $region14: #{sparsemax.1} parent=0
    _
  %s4 = ssub.s32 1, %s2
  %s5 = scalar_select 0, %s4, %s2
  // Predicated region
  $region2: #{sparsemax.1} parent=0 // pred_check
    _
  $region3: #{sparsemax.1} parent=0 // pred_check_branch
    %7 = sbr.rel (0) target = $region5
  $region4: #{sparsemax.1} parent=0 // pred_region
    _
  $region5: #{sparsemax.1} parent=0 // pred_fallthru
    _
  %v8 = vld [vmem:[%s0] sm:$0xff]
  %v9 = vld [vmem:[%s0 + $0x8] sm:$0xff]
  %v10 = vmax.f32 %v8, %v9
  %v11 = vrot.slane %v10, 4
  %v12 = vmax.f32 %v10, %v11
  %v13 = vrot.slane %v12, 2
  %v14 = vmax.f32 %v12, %v13
  %v15 = vrot.slane %v14, 1
  %v16 = vmax.f32 %v14, %v15
  %v17 = vsub.f32 %v8, %v16
  %v18 = vsub.f32 %v9, %v16
  %v19 = vperm.slane %v17, 0
  %vm20 = vcmp.ge.f32.partialorder %v19, %v17
  %vm21 = vcmp.ge.f32.partialorder %v19, %v18
  %v22 = vsel %vm20, 1.0, 0.0
  %v23 = vsel %vm21, 1.0, 0.0
  %v24 = vadd.f32 %v22, 0.0
  %v25 = vadd.f32 %v23, 0.0
  %v26 = vsel %vm20, %v19, 0.0
  %v27 = vsel %vm21, %v19, 0.0
  %v28 = vadd.f32 %v26, 0.0
  %v29 = vadd.f32 %v27, 0.0
  %v30 = vperm.slane %v17, 1
  %vm31 = vcmp.ge.f32.partialorder %v30, %v17
  %vm32 = vcmp.ge.f32.partialorder %v30, %v18
  %v33 = vsel %vm31, 1.0, 0.0
  %v34 = vsel %vm32, 1.0, 0.0
  %v35 = vadd.f32 %v24, %v33
  %v36 = vadd.f32 %v25, %v34
  %v37 = vsel %vm31, %v30, 0.0
  %v38 = vsel %vm32, %v30, 0.0
  %v39 = vadd.f32 %v28, %v37
  %v40 = vadd.f32 %v29, %v38
  %v41 = vperm.slane %v17, 2
  %vm42 = vcmp.ge.f32.partialorder %v41, %v17
  %vm43 = vcmp.ge.f32.partialorder %v41, %v18
  %v44 = vsel %vm42, 1.0, 0.0
  %v45 = vsel %vm43, 1.0, 0.0
  %v46 = vadd.f32 %v35, %v44
  %v47 = vadd.f32 %v36, %v45
  %v48 = vsel %vm42, %v41, 0.0
  %v49 = vsel %vm43, %v41, 0.0
  %v50 = vadd.f32 %v39, %v48
  %v51 = vadd.f32 %v40, %v49
  %v52 = vperm.slane %v17, 3
  %vm53 = vcmp.ge.f32.partialorder %v52, %v17
  %vm54 = vcmp.ge.f32.partialorder %v52, %v18
  %v55 = vsel %vm53, 1.0, 0.0
  %v56 = vsel %vm54, 1.0, 0.0
  %v57 = vadd.f32 %v46, %v55
  %v58 = vadd.f32 %v47, %v56
  %v59 = vsel %vm53, %v52, 0.0
  %v60 = vsel %vm54, %v52, 0.0
  %v61 = vadd.f32 %v50, %v59
  %v62 = vadd.f32 %v51, %v60
  %v63 = vperm.slane %v17, 4
  %vm64 = vcmp.ge.f32.partialorder %v63, %v17
  %vm65 = vcmp.ge.f32.partialorder %v63, %v18
  %v66 = vsel %vm64, 1.0, 0.0
  %v67 = vsel %vm65, 1.0, 0.0
  %v68 = vadd.f32 %v57, %v66
  %v69 = vadd.f32 %v58, %v67
  %v70 = vsel %vm64, %v63, 0.0
  %v71 = vsel %vm65, %v63, 0.0
  %v72 = vadd.f32 %v61, %v70
  %v73 = vadd.f32 %v62, %v71
  %v74 = vperm.slane %v17, 5
  %vm75 = vcmp.ge.f32.partialorder %v74, %v17
  %vm76 = vcmp.ge.f32.partialorder %v74, %v18
  %v77 = vsel %vm75, 1.0, 0.0
  %v78 = vsel %vm76, 1.0, 0.0
  %v79 = vadd.f32 %v68, %v77
  %v80 = vadd.f32 %v69, %v78
  %v81 = vsel %vm75, %v74, 0.0
  %v82 = vsel %vm76, %v74, 0.0
  %v83 = vadd.f32 %v72, %v81
  %v84 = vadd.f32 %v73, %v82
  %v85 = vperm.slane %v17, 6
  %vm86 = vcmp.ge.f32.partialorder %v85, %v17
  %vm87 = vcmp.ge.f32.partialorder %v85, %v18
  %v88 = vsel %vm86, 1.0, 0.0
  %v89 = vsel %vm87, 1.0, 0.0
  %v90 = vadd.f32 %v79, %v88
  %v91 = vadd.f32 %v80, %v89
  %v92 = vsel %vm86, %v85, 0.0
  %v93 = vsel %vm87, %v85, 0.0
  %v94 = vadd.f32 %v83, %v92
  %v95 = vadd.f32 %v84, %v93
  %v96 = vperm.slane %v17, 7
  %vm97 = vcmp.ge.f32.partialorder %v96, %v17
  %vm98 = vcmp.ge.f32.partialorder %v96, %v18
  %v99 = vsel %vm97, 1.0, 0.0
  %v100 = vsel %vm98, 1.0, 0.0
  %v101 = vadd.f32 %v90, %v99
  %v102 = vadd.f32 %v91, %v100
  %v103 = vsel %vm97, %v96, 0.0
  %v104 = vsel %vm98, %v96, 0.0
  %v105 = vadd.f32 %v94, %v103
  %v106 = vadd.f32 %v95, %v104
  %v107 = vperm.slane %v18, 0
  %vm108 = vcmp.ge.f32.partialorder %v107, %v17
  %vm109 = vcmp.ge.f32.partialorder %v107, %v18
  %v110 = vsel %vm108, 1.0, 0.0
  %v111 = vsel %vm109, 1.0, 0.0
  %v112 = vadd.f32 %v101, %v110
  %v113 = vadd.f32 %v102, %v111
  %v114 = vsel %vm108, %v107, 0.0
  %v115 = vsel %vm109, %v107, 0.0
  %v116 = vadd.f32 %v105, %v114
  %v117 = vadd.f32 %v106, %v115
  %v118 = vperm.slane %v18, 1
  %vm119 = vcmp.ge.f32.partialorder %v118, %v17
  %vm120 = vcmp.ge.f32.partialorder %v118, %v18
  %v121 = vsel %vm119, 1.0, 0.0
  %v122 = vsel %vm120, 1.0, 0.0
  %v123 = vadd.f32 %v112, %v121
  %v124 = vadd.f32 %v113, %v122
  %v125 = vsel %vm119, %v118, 0.0
  %v126 = vsel %vm120, %v118, 0.0
  %v127 = vadd.f32 %v116, %v125
  %v128 = vadd.f32 %v117, %v126
  %v129 = vperm.slane %v18, 2
  %vm130 = vcmp.ge.f32.partialorder %v129, %v17
  %vm131 = vcmp.ge.f32.partialorder %v129, %v18
  %v132 = vsel %vm130, 1.0, 0.0
  %v133 = vsel %vm131, 1.0, 0.0
  %v134 = vadd.f32 %v123, %v132
  %v135 = vadd.f32 %v124, %v133
  %v136 = vsel %vm130, %v129, 0.0
  %v137 = vsel %vm131, %v129, 0.0
  %v138 = vadd.f32 %v127, %v136
  %v139 = vadd.f32 %v128, %v137
  %v140 = vperm.slane %v18, 3
  %vm141 = vcmp.ge.f32.partialorder %v140, %v17
  %vm142 = vcmp.ge.f32.partialorder %v140, %v18
  %v143 = vsel %vm141, 1.0, 0.0
  %v144 = vsel %vm142, 1.0, 0.0
  %v145 = vadd.f32 %v134, %v143
  %v146 = vadd.f32 %v135, %v144
  %v147 = vsel %vm141, %v140, 0.0
  %v148 = vsel %vm142, %v140, 0.0
  %v149 = vadd.f32 %v138, %v147
  %v150 = vadd.f32 %v139, %v148
  %v151 = vperm.slane %v18, 4
  %vm152 = vcmp.ge.f32.partialorder %v151, %v17
  %vm153 = vcmp.ge.f32.partialorder %v151, %v18
  %v154 = vsel %vm152, 1.0, 0.0
  %v155 = vsel %vm153, 1.0, 0.0
  %v156 = vadd.f32 %v145, %v154
  %v157 = vadd.f32 %v146, %v155
  %v158 = vsel %vm152, %v151, 0.0
  %v159 = vsel %vm153, %v151, 0.0
  %v160 = vadd.f32 %v149, %v158
  %v161 = vadd.f32 %v150, %v159
  %v162 = vperm.slane %v18, 5
  %vm163 = vcmp.ge.f32.partialorder %v162, %v17
  %vm164 = vcmp.ge.f32.partialorder %v162, %v18
  %v165 = vsel %vm163, 1.0, 0.0
  %v166 = vsel %vm164, 1.0, 0.0
  %v167 = vadd.f32 %v156, %v165
  %v168 = vadd.f32 %v157, %v166
  %v169 = vsel %vm163, %v162, 0.0
  %v170 = vsel %vm164, %v162, 0.0
  %v171 = vadd.f32 %v160, %v169
  %v172 = vadd.f32 %v161, %v170
  %v173 = vperm.slane %v18, 6
  %vm174 = vcmp.ge.f32.partialorder %v173, %v17
  %vm175 = vcmp.ge.f32.partialorder %v173, %v18
  %v176 = vsel %vm174, 1.0, 0.0
  %v177 = vsel %vm175, 1.0, 0.0
  %v178 = vadd.f32 %v167, %v176
  %v179 = vadd.f32 %v168, %v177
  %v180 = vsel %vm174, %v173, 0.0
  %v181 = vsel %vm175, %v173, 0.0
  %v182 = vadd.f32 %v171, %v180
  %v183 = vadd.f32 %v172, %v181
  %v184 = vperm.slane %v18, 7
  %vm185 = vcmp.ge.f32.partialorder %v184, %v17
  %vm186 = vcmp.ge.f32.partialorder %v184, %v18
  %v187 = vsel %vm185, 1.0, 0.0
  %v188 = vsel %vm186, 1.0, 0.0
  %v189 = vadd.f32 %v178, %v187
  %v190 = vadd.f32 %v179, %v188
  %v191 = vsel %vm185, %v184, 0.0
  %v192 = vsel %vm186, %v184, 0.0
  %v193 = vadd.f32 %v182, %v191
  %v194 = vadd.f32 %v183, %v192
  %v195 = vmul.f32 %v189, %v17
  %v196 = vmul.f32 %v190, %v18
  %v197 = vadd.f32 %v195, 1.0
  %v198 = vadd.f32 %v196, 1.0
  %vm199 = vcmp.gt.f32.partialorder %v197, %v193
  %vm200 = vcmp.gt.f32.partialorder %v198, %v194
  %v201 = vsel %vm199, %v189, 0.0
  %v202 = vsel %vm200, %v190, 0.0
  %v203 = vmax.f32 %v201, %v202
  %v204 = vrot.slane %v203, 4
  %v205 = vmax.f32 %v203, %v204
  %v206 = vrot.slane %v205, 2
  %v207 = vmax.f32 %v205, %v206
  %v208 = vrot.slane %v207, 1
  %v209 = vmax.f32 %v207, %v208
  %v210 = vsel %vm199, %v17, 0.0
  %v211 = vsel %vm200, %v18, 0.0
  %v212 = vadd.f32 %v210, %v211
  %v213 = vrot.slane %v212, 4
  %v214 = vadd.f32 %v212, %v213
  %v215 = vrot.slane %v214, 2
  %v216 = vadd.f32 %v214, %v215
  %v217 = vrot.slane %v216, 1
  %v218 = vadd.f32 %v216, %v217
  %v219 = vsub.f32 %v218, 1.0
  %v220 = vrcp.pop %v209
  %v221 = vmul.f32 %v209, %v220
  %v222 = vsub.f32 1.0, %v221
  %v223 = vmul.f32 %v220, %v222
  %v224 = vadd.f32 %v220, %v223
  %vm225 = vweird.f32 %v209
  %vm226 = vweird.f32 %v220
  %vm227 = vmor %vm225, %vm226
  %v228 = vsel %vm227, %v220, %v224
  %v229 = vand.u32 2147483647, %v209
  %vm230 = vcmp.eq.f32.partialorder %v229, 8.507059e+37
  %v231 = vand.u32 %v209, 2147483648
  %v232 = vor.u32 1.1754944e-38, %v231
  %v233 = vsel %vm230, %v232, %v228
  %v234 = vmul.f32 %v219, %v233
  %v235 = vsub.f32 %v17, %v234
  %v236 = vsub.f32 %v18, %v234
  %v237 = vmax.f32 %v235, 0.0
  %v238 = vmax.f32 %v236, 0.0
  %239 = vst [vmem:[%s1] sm:$0xff] %v237
  %240 = vst [vmem:[%s1 + $0x8] sm:$0xff] %v238
  // Predicated region
  $region6: #{sparsemax.1} parent=0 // pred_check
    _
  $region7: #{sparsemax.1} parent=0 // pred_check_branch
    %242 = sbr.rel (0) target = $region9
  $region8: #{sparsemax.1} parent=0 // pred_region
    _
  $region9: #{sparsemax.1} parent=0 // pred_fallthru
    _
  // Predicated region
  $region10: #{sparsemax.1} parent=0 // pred_check
    _
  $region11: #{sparsemax.1} parent=0 // pred_check_branch
    %244 = sbr.rel (0) target = $region13
  $region12: #{sparsemax.1} parent=0 // pred_region
    _
  $region13: #{sparsemax.1} parent=0 // pred_fallthru
    _

</llo_original>
